<compile_context>
chip_gen: v5e
topology: v5e:2x2
jax: 0.10.0
libtpu: 0.0.40
codegen_flags: <defaults>
</compile_context>

<pallas_src>
import functools

import jax
import jax.numpy as jnp
from jax import lax
from jax.experimental import pallas as pl
from jax.experimental.pallas import tpu as pltpu

NUM_DISCRETE = 4
DIM_CONT = 2
HIDDEN = (64, 64, 32)
F_AUG = 8  # 4 discrete + 2 continuous + constant-1 row + zero pad row


# ----------------------------------------------------------------------------
# Kernel: whole forward pass for one batch tile (batch on lanes).
# ----------------------------------------------------------------------------
def _energy_kernel(x_ref,                  # (8, tb)   f32
                   w_in,                   # (160, 8)  bf16  (biases folded)
                   w2, b2,                 # (128,128) bf16, (128,1) f32
                   w3,                     # (32, 128) bf16
                   f2w, f2b,               # (32, 32)  bf16, (32,1) f32
                   f3w, f3b,               # (32, 1)   f32,  (1,1)  f32
                   out_ref):               # (1, tb)   f32
    h0, h1, h2 = HIDDEN
    relu = lambda v: jnp.maximum(v, 0.0)
    bf16 = jnp.bfloat16

    xb = x_ref[...].astype(bf16)                                    # (8, tb)

    # Stage 1: (160,8)@(8,tb) covers discrete L1, continuous L1 and the
    # discrete_proj contribution to fusion L1 (pre-multiplied by f1w_d).
    # The constant-1 input row carries all stage-1 biases + the fused b3.
    z1 = jnp.dot(w_in[...], xb, preferred_element_type=jnp.float32)  # (160,tb)
    a1 = relu(z1[: 2 * h0])                                          # (128,tb)
    p1 = z1[2 * h0:]                                                 # (32, tb)

    # Stage 2: blockdiag(d2w, c2w).  ReLU only on the discrete half (rows
    # 0:64); mask is a single (128,1) column broadcast along lanes.
    z2 = jnp.dot(w2[...], a1.astype(bf16),
                 preferred_element_type=jnp.float32) + b2[...]       # (128,tb)
    sub = lax.broadcasted_iota(jnp.int32, (2 * h1, 1), 0)
    a2 = jnp.where(sub < h1, relu(z2), z2)                           # (128,tb)

    # Stage 3 (discrete L3 folded into fusion L1) + fusion L1 (bias already in
    # p1), then fusion L2.
    f1 = relu(jnp.dot(w3[...], a2.astype(bf16),
                      preferred_element_type=jnp.float32) + p1)      # (32, tb)
    f2 = relu(jnp.dot(f2w[...], f1.astype(bf16),
                      preferred_element_type=jnp.float32) + f2b[...])  # (32,tb)

    # Final Linear(32,1): VPU multiply + sublane reduce -> lane-dense (1, tb).
    e = jnp.sum(f2 * f3w[...], axis=0, keepdims=True) + f3b[...]
    out_ref[...] = e.astype(out_ref.dtype)


# ----------------------------------------------------------------------------
# Parameter setup (deterministic, PyTorch-like uniform init) and host-side
# weight packing / fusion / transposition.
# ----------------------------------------------------------------------------
def init_params(key):
    def linear(key, fan_in, fan_out):
        kw, kb = jax.random.split(key)
        bound = 1.0 / jnp.sqrt(fan_in)
        w = jax.random.uniform(kw, (fan_in, fan_out), jnp.float32, -bound, bound)
        b = jax.random.uniform(kb, (1, fan_out), jnp.float32, -bound, bound)
        return w, b

    keys = jax.random.split(key, 9)
    h0, h1, h2 = HIDDEN
    p = {}
    p["d1w"], p["d1b"] = linear(keys[0], NUM_DISCRETE, h0)
    p["d2w"], p["d2b"] = linear(keys[1], h0, h1)
    p["d3w"], p["d3b"] = linear(keys[2], h1, h1)
    p["c1w"], p["c1b"] = linear(keys[3], DIM_CONT, h0)
    p["c2w"], p["c2b"] = linear(keys[4], h0, h1)
    p["pw"], p["pb"] = linear(keys[5], NUM_DISCRETE, h1)
    p["f1w"], p["f1b"] = linear(keys[6], h1 * 2, h2)
    p["f2w"], p["f2b"] = linear(keys[7], h2, h2)
    p["f3w"], p["f3b"] = linear(keys[8], h2, 1)
    return p


def pack_params(p, *, mxu_dtype=jnp.bfloat16):
    """Fuse, transpose (batch-on-lanes) and bf16-cast the per-layer params."""
    h0, h1, h2 = HIDDEN
    nd, nc = NUM_DISCRETE, DIM_CONT
    f1w_d = p["f1w"][:h1]                    # (64, 32) fusion L1, discrete half
    f1w_c = p["f1w"][h1:]                    # (64, 32) fusion L1, continuous half

    # Stage-1 fused weight, built in (in, out) orientation then transposed:
    #   cols 0:64    = discrete L1 (rows 0:4 = x_d)
    #   cols 64:128  = continuous L1 (rows 4:6 = x_c)
    #   cols 128:160 = discrete_proj @ f1w_d (rows 0:4 = x_d)
    #   row 6 (constant-1 input row) = [d1b | c1b | pb@f1w_d + d3b@f1w_d + f1b]
    #   row 7 = zero pad (K rounds up to the 8-sublane tile anyway)
    w_in = jnp.zeros((F_AUG, 2 * h0 + h2), jnp.float32)
    w_in = w_in.at[:nd, :h0].set(p["d1w"])
    w_in = w_in.at[nd:nd + nc, h0:2 * h0].set(p["c1w"])
    w_in = w_in.at[:nd, 2 * h0:].set(p["pw"] @ f1w_d)
    bias_row = jnp.concatenate(
        [p["d1b"], p["c1b"], p["pb"] @ f1w_d + p["d3b"] @ f1w_d + p["f1b"]],
        axis=1)                                                    # (1, 160)
    w_in = w_in.at[nd + nc].set(bias_row[0])

    # Stage-2 weight: blockdiag(d2w, c2w); bias stays an f32 column.
    w2 = jnp.zeros((2 * h0, 2 * h1), jnp.float32)
    w2 = w2.at[:h0, :h1].set(p["d2w"])
    w2 = w2.at[h0:, h1:].set(p["c2w"])
    b2_col = jnp.concatenate([p["d2b"], p["c2b"]], axis=1).T       # (128, 1)

    # Stage-3 (discrete L3) + fusion L1 folded (concat + h_d + proj add fused).
    w3 = jnp.concatenate([p["d3w"] @ f1w_d, f1w_c], axis=0)        # (128, 32)

    return dict(
        w_in=w_in.T.astype(mxu_dtype),       # (160, 8)   bf16
        w2=w2.T.astype(mxu_dtype),           # (128, 128) bf16
        b2=b2_col,                           # (128, 1)   f32
        w3=w3.T.astype(mxu_dtype),           # (32, 128)  bf16
        f2w=p["f2w"].T.astype(mxu_dtype),    # (32, 32)   bf16
        f2b=p["f2b"].T,                      # (32, 1)    f32
        f3w=p["f3w"],                        # (32, 1)    f32
        f3b=p["f3b"],                        # (1, 1)     f32
    )


_PACKED_ORDER = ("w_in", "w2", "b2", "w3", "f2w", "f2b", "f3w", "f3b")


# ----------------------------------------------------------------------------
# Wrapper
# ----------------------------------------------------------------------------
@functools.partial(jax.jit, static_argnames=("tb",))
def hybrid_energy_forward(x, packed, *, tb=512):
    B, F = x.shape
    assert F == NUM_DISCRETE + DIM_CONT
    assert B % tb == 0, "pad batch to a multiple of tb (padded rows give garbage energies; slice them off)"
    assert tb % 128 == 0, "batch rides on lanes; tb must be a multiple of 128"

    # Batch onto lanes + constant-1 bias row + zero pad row -> (8, B).
    ones = jnp.ones((B, 1), x.dtype)
    zeros = jnp.zeros((B, 1), x.dtype)
    x_aug = jnp.concatenate([x, ones, zeros], axis=1).T            # (8, B)

    flat = [packed[name] for name in _PACKED_ORDER]

    in_specs = [pl.BlockSpec((F_AUG, tb), lambda i: (0, i))]
    in_specs += [pl.BlockSpec(w.shape, lambda i: (0, 0)) for w in flat]

    # Advisory cost estimate (per-column MACs of the 4 fused matmuls + reduce).
    macs_per_col = (F_AUG * (2 * HIDDEN[0] + HIDDEN[2]) + 128 * 128
                    + 128 * HIDDEN[2] + HIDDEN[2] * HIDDEN[2] + HIDDEN[2])
    cost = pl.CostEstimate(
        flops=2 * B * macs_per_col,
        transcendentals=0,
        bytes_accessed=x_aug.size * 4 + B * 4
                       + sum(w.size * w.dtype.itemsize for w in flat))

    out = pl.pallas_call(
        _energy_kernel,
        out_shape=jax.ShapeDtypeStruct((1, B), jnp.float32),
        grid_spec=pltpu.PrefetchScalarGridSpec(
            num_scalar_prefetch=0,
            grid=(B // tb,),
            in_specs=in_specs,
            out_specs=pl.BlockSpec((1, tb), lambda i: (0, i)),
        ),
        compiler_params=pltpu.CompilerParams(
            dimension_semantics=("parallel",),
            # Headroom for large tb on v5e's 16 MiB scoped-VMEM default.
            vmem_limit_bytes=32 * 1024 * 1024),
        cost_estimate=cost,
    )(x_aug, *flat)

    return out.reshape(B)  # equivalent of energy.squeeze()


# ----------------------------------------------------------------------------
# Pure-JAX reference (mirrors the PyTorch forward exactly, unfused f32 weights).
# ----------------------------------------------------------------------------
def reference_forward(x, p):
    relu = jax.nn.relu
    x_d = x[:, :NUM_DISCRETE]
    x_c = x[:, NUM_DISCRETE:]
    h = relu(x_d @ p["d1w"] + p["d1b"])
    h = relu(h @ p["d2w"] + p["d2b"])
    h_d = h @ p["d3w"] + p["d3b"]
    g = relu(x_c @ p["c1w"] + p["c1b"])
    h_c = g @ p["c2w"] + p["c2b"]
    proj = x_d @ p["pw"] + p["pb"]
    cat = jnp.concatenate([h_d + proj, h_c], axis=1)
    f = relu(cat @ p["f1w"] + p["f1b"])
    f = relu(f @ p["f2w"] + p["f2b"])
    e = f @ p["f3w"] + p["f3b"]
    return e[:, 0]


if __name__ == "__main__":
    key = jax.random.PRNGKey(0)
    k_param, k_x = jax.random.split(key)

    params = init_params(k_param)
    packed = pack_params(params)

    # 8 grid steps -> >=3 pipelined steps per TensorCore on v7x megacore.
    B, tb = 1024, 128
    x = jax.random.normal(k_x, (B, NUM_DISCRETE + DIM_CONT), jnp.float32)

    energy = hybrid_energy_forward(x, packed, tb=tb)
    energy = jax.block_until_ready(energy)

    ref = reference_forward(x, params)
    assert energy.shape == (B,)
    # bf16 MXU operands (f32 accumulation) -> loosened tolerance vs f32 reference.
    assert jnp.allclose(energy, ref, atol=3e-2, rtol=3e-2), \
        float(jnp.max(jnp.abs(energy - ref)))

    print("KERNEL_OK")
</pallas_src>

<mosaic_0001>
module attributes {stable_mosaic.version = 11 : i64} {
  func.func @_energy_kernel(%arg0: i32, %arg1: memref<8x128xf32, #tpu.memory_space<vmem>>, %arg2: memref<160x8xbf16, #tpu.memory_space<vmem>>, %arg3: memref<128x128xbf16, #tpu.memory_space<vmem>>, %arg4: memref<128x1xf32, #tpu.memory_space<vmem>>, %arg5: memref<32x128xbf16, #tpu.memory_space<vmem>>, %arg6: memref<32x32xbf16, #tpu.memory_space<vmem>>, %arg7: memref<32x1xf32, #tpu.memory_space<vmem>>, %arg8: memref<32x1xf32, #tpu.memory_space<vmem>>, %arg9: memref<1x1xf32, #tpu.memory_space<vmem>>, %arg10: memref<1x128xf32, #tpu.memory_space<vmem>>) attributes {dimension_semantics = [#tpu.dimension_semantics<parallel>], iteration_bounds = array<i64: 8>, scalar_prefetch = 0 : i64, scratch_operands = 0 : i64, tpu.core_type = #tpu.core_type<tc>, window_params = [{transform_indices = @transform_0, window_bounds = array<i64: 8, 128>}, {pipeline_mode = #tpu.pipeline_mode<synchronous>, transform_indices = @transform_1, window_bounds = array<i64: 160, 8>}, {pipeline_mode = #tpu.pipeline_mode<synchronous>, transform_indices = @transform_2, window_bounds = array<i64: 128, 128>}, {pipeline_mode = #tpu.pipeline_mode<synchronous>, transform_indices = @transform_3, window_bounds = array<i64: 128, 1>}, {pipeline_mode = #tpu.pipeline_mode<synchronous>, transform_indices = @transform_4, window_bounds = array<i64: 32, 128>}, {pipeline_mode = #tpu.pipeline_mode<synchronous>, transform_indices = @transform_5, window_bounds = array<i64: 32, 32>}, {pipeline_mode = #tpu.pipeline_mode<synchronous>, transform_indices = @transform_6, window_bounds = array<i64: 32, 1>}, {pipeline_mode = #tpu.pipeline_mode<synchronous>, transform_indices = @transform_7, window_bounds = array<i64: 32, 1>}, {pipeline_mode = #tpu.pipeline_mode<synchronous>, transform_indices = @transform_8, window_bounds = array<i64: 1, 1>}, {transform_indices = @transform_9, window_bounds = array<i64: 1, 128>}]} {
    %c0 = arith.constant 0 : index
    %c0_0 = arith.constant 0 : index
    %0 = vector.load %arg1[%c0, %c0_0] : memref<8x128xf32, #tpu.memory_space<vmem>>, vector<8x128xf32>
    %1 = arith.truncf %0 : vector<8x128xf32> to vector<8x128xbf16>
    %c0_1 = arith.constant 0 : index
    %c0_2 = arith.constant 0 : index
    %2 = vector.load %arg2[%c0_1, %c0_2] : memref<160x8xbf16, #tpu.memory_space<vmem>>, vector<160x8xbf16>
    %cst = arith.constant dense<0.000000e+00> : vector<160x128xf32>
    %3 = tpu.matmul %2, %1, %cst {dimension_numbers = #tpu.dot_dimension_numbers<[1], [0], [0], [1], [0, 0, 1, 1], [], []>} : vector<160x8xbf16>, vector<8x128xbf16>, vector<160x128xf32> -> vector<160x128xf32>
    %4 = vector.extract_strided_slice %3 {offsets = [0, 0], sizes = [128, 128], strides = [1, 1]} : vector<160x128xf32> to vector<128x128xf32>
    %cst_3 = arith.constant 0.000000e+00 : f32
    %5 = vector.broadcast %cst_3 : f32 to vector<128x128xf32>
    %6 = arith.maximumf %4, %5 : vector<128x128xf32>
    %7 = vector.extract_strided_slice %3 {offsets = [128, 0], sizes = [32, 128], strides = [1, 1]} : vector<160x128xf32> to vector<32x128xf32>
    %c0_4 = arith.constant 0 : index
    %c0_5 = arith.constant 0 : index
    %8 = vector.load %arg3[%c0_4, %c0_5] : memref<128x128xbf16, #tpu.memory_space<vmem>>, vector<128x128xbf16>
    %9 = arith.truncf %6 : vector<128x128xf32> to vector<128x128xbf16>
    %cst_6 = arith.constant dense<0.000000e+00> : vector<128x128xf32>
    %10 = tpu.matmul %8, %9, %cst_6 {dimension_numbers = #tpu.dot_dimension_numbers<[1], [0], [0], [1], [0, 0, 1, 1], [], []>} : vector<128x128xbf16>, vector<128x128xbf16>, vector<128x128xf32> -> vector<128x128xf32>
    %c0_7 = arith.constant 0 : index
    %c0_8 = arith.constant 0 : index
    %11 = vector.load %arg4[%c0_7, %c0_8] : memref<128x1xf32, #tpu.memory_space<vmem>>, vector<128x1xf32>
    %12 = vector.broadcast %11 : vector<128x1xf32> to vector<128x128xf32>
    %13 = arith.addf %10, %12 : vector<128x128xf32>
    %14 = tpu.iota {dimensions = array<i32: 0>} : vector<128x1xi32>
    %c64_i32 = arith.constant 64 : i32
    %15 = vector.broadcast %c64_i32 : i32 to vector<128x1xi32>
    %16 = arith.cmpi slt, %14, %15 : vector<128x1xi32>
    %cst_9 = arith.constant 0.000000e+00 : f32
    %17 = vector.broadcast %cst_9 : f32 to vector<128x128xf32>
    %18 = arith.maximumf %13, %17 : vector<128x128xf32>
    %19 = vector.shape_cast %16 : vector<128x1xi1> to vector<128x1xi1>
    %20 = vector.broadcast %19 : vector<128x1xi1> to vector<128x128xi1>
    %21 = arith.select %20, %18, %13 : vector<128x128xi1>, vector<128x128xf32>
    %c0_10 = arith.constant 0 : index
    %c0_11 = arith.constant 0 : index
    %22 = vector.load %arg5[%c0_10, %c0_11] : memref<32x128xbf16, #tpu.memory_space<vmem>>, vector<32x128xbf16>
    %23 = arith.truncf %21 : vector<128x128xf32> to vector<128x128xbf16>
    %cst_12 = arith.constant dense<0.000000e+00> : vector<32x128xf32>
    %24 = tpu.matmul %22, %23, %cst_12 {dimension_numbers = #tpu.dot_dimension_numbers<[1], [0], [0], [1], [0, 0, 1, 1], [], []>} : vector<32x128xbf16>, vector<128x128xbf16>, vector<32x128xf32> -> vector<32x128xf32>
    %25 = arith.addf %24, %7 : vector<32x128xf32>
    %cst_13 = arith.constant 0.000000e+00 : f32
    %26 = vector.broadcast %cst_13 : f32 to vector<32x128xf32>
    %27 = arith.maximumf %25, %26 : vector<32x128xf32>
    %c0_14 = arith.constant 0 : index
    %c0_15 = arith.constant 0 : index
    %28 = vector.load %arg6[%c0_14, %c0_15] : memref<32x32xbf16, #tpu.memory_space<vmem>>, vector<32x32xbf16>
    %29 = arith.truncf %27 : vector<32x128xf32> to vector<32x128xbf16>
    %cst_16 = arith.constant dense<0.000000e+00> : vector<32x128xf32>
    %30 = tpu.matmul %28, %29, %cst_16 {dimension_numbers = #tpu.dot_dimension_numbers<[1], [0], [0], [1], [0, 0, 1, 1], [], []>} : vector<32x32xbf16>, vector<32x128xbf16>, vector<32x128xf32> -> vector<32x128xf32>
    %c0_17 = arith.constant 0 : index
    %c0_18 = arith.constant 0 : index
    %31 = vector.load %arg7[%c0_17, %c0_18] : memref<32x1xf32, #tpu.memory_space<vmem>>, vector<32x1xf32>
    %32 = vector.broadcast %31 : vector<32x1xf32> to vector<32x128xf32>
    %33 = arith.addf %30, %32 : vector<32x128xf32>
    %cst_19 = arith.constant 0.000000e+00 : f32
    %34 = vector.broadcast %cst_19 : f32 to vector<32x128xf32>
    %35 = arith.maximumf %33, %34 : vector<32x128xf32>
    %c0_20 = arith.constant 0 : index
    %c0_21 = arith.constant 0 : index
    %36 = vector.load %arg8[%c0_20, %c0_21] : memref<32x1xf32, #tpu.memory_space<vmem>>, vector<32x1xf32>
    %37 = vector.broadcast %36 : vector<32x1xf32> to vector<32x128xf32>
    %38 = arith.mulf %35, %37 : vector<32x128xf32>
    %cst_22 = arith.constant dense<0.000000e+00> : vector<128xf32>
    %39 = vector.multi_reduction <add>, %38, %cst_22 [0] : vector<32x128xf32> to vector<128xf32>
    %40 = vector.shape_cast %39 : vector<128xf32> to vector<1x128xf32>
    %c0_23 = arith.constant 0 : index
    %c0_24 = arith.constant 0 : index
    %41 = vector.load %arg9[%c0_23, %c0_24] : memref<1x1xf32, #tpu.memory_space<vmem>>, vector<1x1xf32>
    %42 = vector.broadcast %41 : vector<1x1xf32> to vector<1x128xf32>
    %43 = arith.addf %40, %42 : vector<1x128xf32>
    %c0_25 = arith.constant 0 : index
    %c0_26 = arith.constant 0 : index
    %44 = vector.load %arg10[%c0_25, %c0_26] : memref<1x128xf32, #tpu.memory_space<vmem>>, vector<1x128xf32>
    tpu.vector_store %arg10[%c0_25, %c0_26], %43 {strides = array<i32>} : memref<1x128xf32, #tpu.memory_space<vmem>>, vector<1x128xf32>,
    return
  }
  func.func @transform_0(%arg0: i32) -> (i32, i32) {
    %c0_i32 = arith.constant 0 : i32
    %c0_i32_0 = arith.constant 0 : i32
    return %c0_i32, %arg0 : i32, i32
  }
  func.func @transform_1(%arg0: i32) -> (i32, i32) {
    %c0_i32 = arith.constant 0 : i32
    %c0_i32_0 = arith.constant 0 : i32
    %c0_i32_1 = arith.constant 0 : i32
    return %c0_i32, %c0_i32_0 : i32, i32
  }
  func.func @transform_2(%arg0: i32) -> (i32, i32) {
    %c0_i32 = arith.constant 0 : i32
    %c0_i32_0 = arith.constant 0 : i32
    %c0_i32_1 = arith.constant 0 : i32
    return %c0_i32, %c0_i32_0 : i32, i32
  }
  func.func @transform_3(%arg0: i32) -> (i32, i32) {
    %c0_i32 = arith.constant 0 : i32
    %c0_i32_0 = arith.constant 0 : i32
    %c0_i32_1 = arith.constant 0 : i32
    return %c0_i32, %c0_i32_0 : i32, i32
  }
  func.func @transform_4(%arg0: i32) -> (i32, i32) {
    %c0_i32 = arith.constant 0 : i32
    %c0_i32_0 = arith.constant 0 : i32
    %c0_i32_1 = arith.constant 0 : i32
    return %c0_i32, %c0_i32_0 : i32, i32
  }
  func.func @transform_5(%arg0: i32) -> (i32, i32) {
    %c0_i32 = arith.constant 0 : i32
    %c0_i32_0 = arith.constant 0 : i32
    %c0_i32_1 = arith.constant 0 : i32
    return %c0_i32, %c0_i32_0 : i32, i32
  }
  func.func @transform_6(%arg0: i32) -> (i32, i32) {
    %c0_i32 = arith.constant 0 : i32
    %c0_i32_0 = arith.constant 0 : i32
    %c0_i32_1 = arith.constant 0 : i32
    return %c0_i32, %c0_i32_0 : i32, i32
  }
  func.func @transform_7(%arg0: i32) -> (i32, i32) {
    %c0_i32 = arith.constant 0 : i32
    %c0_i32_0 = arith.constant 0 : i32
    %c0_i32_1 = arith.constant 0 : i32
    return %c0_i32, %c0_i32_0 : i32, i32
  }
  func.func @transform_8(%arg0: i32) -> (i32, i32) {
    %c0_i32 = arith.constant 0 : i32
    %c0_i32_0 = arith.constant 0 : i32
    %c0_i32_1 = arith.constant 0 : i32
    return %c0_i32, %c0_i32_0 : i32, i32
  }
  func.func @transform_9(%arg0: i32) -> (i32, i32) {
    %c0_i32 = arith.constant 0 : i32
    %c0_i32_0 = arith.constant 0 : i32
    return %c0_i32, %arg0 : i32, i32
  }
}

</mosaic_0001>

<llo_original>
// kernel: hybrid_energy_forward.1
$region0: #{hybrid_energy_forward.1}
  #allocation0 [shape = 'u32[]', space=smem, size = 0x4, offset = 0x4, fixed_abs, tag = 'smem constant byte address 0x4 - core index']
  #allocation1 [shape = 'u32[72,128]{1,0:T(1,128)}', space=vmem, size = 0x9000, scoped, tag = 'internal scratch']
  #allocation2 [shape = 'f32[1,1]{1,0:T(1,128)S(1)}', space=vmem, size = 0x200, scoped, tag = 'scoped memory for hybrid_energy_forward.1']
  %s0 = inlined_call_operand.vmem [shape: f32[8,1024], index: 0, kind: input, shape index: {}]
  %s1 = inlined_call_operand.vmem [shape: bf16[160,8], index: 1, kind: input, shape index: {}]
  %s2 = inlined_call_operand.vmem [shape: bf16[128,128], index: 2, kind: input, shape index: {}]
  %s3 = inlined_call_operand.vmem [shape: f32[128,1], index: 3, kind: input, shape index: {}]
  %s4 = inlined_call_operand.vmem [shape: bf16[32,128], index: 4, kind: input, shape index: {}]
  %s5 = inlined_call_operand.vmem [shape: bf16[32,32], index: 5, kind: input, shape index: {}]
  %s6 = inlined_call_operand.vmem [shape: f32[32,1], index: 6, kind: input, shape index: {}]
  %s7 = inlined_call_operand.vmem [shape: f32[32,1], index: 7, kind: input, shape index: {}]
  %s8 = inlined_call_operand.<no memory space> [shape: f32[1,1], index: 8, kind: input, shape index: {}]
  %s9 = inlined_call_operand.hbm [shape: f32[1,1024], index: 9, kind: output, shape index: {}]
  %s10 = sld [smem:[#allocation0]]
  $region69: #{hybrid_energy_forward.1} parent=0
    _
  %s12 = ssub.s32 1, %s10
  %s13 = scalar_select 0, %s12, %s10
  %v14 = vstv %s8
  %15 = vst [vmem:[#allocation2] sm:$0x1] %v14
  $region1: #{hybrid_energy_forward.1} parent=0
    #allocation3 [shape = 'u8[1024]{0}', space=vmem, size = 0x400, scoped, tag = 'output window, operand 0']
    #allocation4 [shape = 's32[2]{0}', space=sflag, size = 0x8, scoped, tag = 'scoped memory for hybrid_energy_forward.1']
    %16 = vsyncpa [#allocation4], 0
    %s17 = scalar_lea.sflag [#allocation4], 1
    %18 = vsyncpa %s17, 0
    loop: start=0, step=1, limit=10
    $region2: #{hybrid_energy_forward.1} parent=1 // loop_pre_header
      _
    $region3: #{hybrid_energy_forward.1} parent=1 // loop_header
      %s20 = sphi 0, %s24
      %p21 = scmp.ge.s32.totalorder %s20, 10
      %s30 = sphi 0, %s32
      %s33 = sphi 0, %s30
      %s34 = sphi 0, %s33
      %s50 = sphi 0, %s34
      %s54 = sphi 0, %s54
      %s56 = sphi 0, %s54
      %s57 = sphi 0, %s56
      %s71 = sphi 0, %s57
      %s75 = sphi 0, %s75
      %s77 = sphi 0, %s75
      %s78 = sphi 0, %s77
      %s92 = sphi 0, %s78
      %s96 = sphi 0, %s96
      %s98 = sphi 0, %s96
      %s99 = sphi 0, %s98
      %s113 = sphi 0, %s99
      %s117 = sphi 0, %s117
      %s119 = sphi 0, %s117
      %s120 = sphi 0, %s119
      %s134 = sphi 0, %s120
      %s138 = sphi 0, %s138
      %s140 = sphi 0, %s138
      %s141 = sphi 0, %s140
      %s155 = sphi 0, %s141
      %s159 = sphi 0, %s159
      %s161 = sphi 0, %s159
      %s162 = sphi 0, %s161
      %s176 = sphi 0, %s162
      %s180 = sphi 0, %s180
      %s182 = sphi 0, %s180
      %s183 = sphi 0, %s182
      %s197 = sphi 0, %s183
      %s201 = sphi 0, %s201
      %s203 = sphi 0, %s201
      %s204 = sphi 0, %s203
      %s218 = sphi 0, %s204
      %s224 = sphi 0, %s226
      %s227 = sphi 0, %s224
      %s228 = sphi 0, %s227
      %s244 = sphi 0, %s228
    $region4: #{hybrid_energy_forward.1} parent=1 // loop_header_branch
      %23 = sbr.rel (%p21) target = $region8
    $region5: #{hybrid_energy_forward.1} parent=1 // loop_body
      %s25 = ssub.s32 %s20, 1
      %s26 = ssub.s32 %s20, 2
      %s27 = sadd.s32 %s20, 1
      %s28 = ssub.s32 %s20, %s27
      %p29 = scmp.eq.s32.totalorder %s28, 0
      %s31 = sadd.s32 %s30, 1
      %s32 = scalar_select %p29, %s30, %s31
      %p35 = pneg %p29
      %p36 = scmp.eq.s32.totalorder %s20, 7
      %p37 = por %p35, %p36
      %p38 = scmp.ne.s32.totalorder %s30, %s33
      %p39 = scmp.eq.s32.totalorder %s20, 0
      %p40 = por %p38, %p39
      %p41 = scmp.ne.s32.totalorder %s30, %s33
      %p42 = scmp.eq.s32.totalorder %s25, 7
      %p43 = por %p41, %p42
      %p44 = scmp.ne.s32.totalorder %s33, %s34
      %p45 = scmp.eq.s32.totalorder %s25, 0
      %p46 = por %p44, %p45
      %p47 = scmp.ne.s32.totalorder %s33, %s34
      %p48 = scmp.eq.s32.totalorder %s26, 7
      %p49 = por %p47, %p48
      %p51 = scmp.ne.s32.totalorder %s34, %s50
      %p52 = scmp.eq.s32.totalorder %s26, 0
      %p53 = por %p51, %p52
      %s55 = sadd.s32 %s54, 1
      %p58 = scmp.eq.s32.totalorder %s20, 7
      %p59 = scmp.ne.s32.totalorder %s54, %s56
      %p60 = scmp.eq.s32.totalorder %s20, 0
      %p61 = por %p59, %p60
      %p62 = scmp.ne.s32.totalorder %s54, %s56
      %p63 = scmp.eq.s32.totalorder %s25, 7
      %p64 = por %p62, %p63
      %p65 = scmp.ne.s32.totalorder %s56, %s57
      %p66 = scmp.eq.s32.totalorder %s25, 0
      %p67 = por %p65, %p66
      %p68 = scmp.ne.s32.totalorder %s56, %s57
      %p69 = scmp.eq.s32.totalorder %s26, 7
      %p70 = por %p68, %p69
      %p72 = scmp.ne.s32.totalorder %s57, %s71
      %p73 = scmp.eq.s32.totalorder %s26, 0
      %p74 = por %p72, %p73
      %s76 = sadd.s32 %s75, 1
      %p79 = scmp.eq.s32.totalorder %s20, 7
      %p80 = scmp.ne.s32.totalorder %s75, %s77
      %p81 = scmp.eq.s32.totalorder %s20, 0
      %p82 = por %p80, %p81
      %p83 = scmp.ne.s32.totalorder %s75, %s77
      %p84 = scmp.eq.s32.totalorder %s25, 7
      %p85 = por %p83, %p84
      %p86 = scmp.ne.s32.totalorder %s77, %s78
      %p87 = scmp.eq.s32.totalorder %s25, 0
      %p88 = por %p86, %p87
      %p89 = scmp.ne.s32.totalorder %s77, %s78
      %p90 = scmp.eq.s32.totalorder %s26, 7
      %p91 = por %p89, %p90
      %p93 = scmp.ne.s32.totalorder %s78, %s92
      %p94 = scmp.eq.s32.totalorder %s26, 0
      %p95 = por %p93, %p94
      %s97 = sadd.s32 %s96, 1
      %p100 = scmp.eq.s32.totalorder %s20, 7
      %p101 = scmp.ne.s32.totalorder %s96, %s98
      %p102 = scmp.eq.s32.totalorder %s20, 0
      %p103 = por %p101, %p102
      %p104 = scmp.ne.s32.totalorder %s96, %s98
      %p105 = scmp.eq.s32.totalorder %s25, 7
      %p106 = por %p104, %p105
      %p107 = scmp.ne.s32.totalorder %s98, %s99
      %p108 = scmp.eq.s32.totalorder %s25, 0
      %p109 = por %p107, %p108
      %p110 = scmp.ne.s32.totalorder %s98, %s99
      %p111 = scmp.eq.s32.totalorder %s26, 7
      %p112 = por %p110, %p111
      %p114 = scmp.ne.s32.totalorder %s99, %s113
      %p115 = scmp.eq.s32.totalorder %s26, 0
      %p116 = por %p114, %p115
      %s118 = sadd.s32 %s117, 1
      %p121 = scmp.eq.s32.totalorder %s20, 7
      %p122 = scmp.ne.s32.totalorder %s117, %s119
      %p123 = scmp.eq.s32.totalorder %s20, 0
      %p124 = por %p122, %p123
      %p125 = scmp.ne.s32.totalorder %s117, %s119
      %p126 = scmp.eq.s32.totalorder %s25, 7
      %p127 = por %p125, %p126
      %p128 = scmp.ne.s32.totalorder %s119, %s120
      %p129 = scmp.eq.s32.totalorder %s25, 0
      %p130 = por %p128, %p129
      %p131 = scmp.ne.s32.totalorder %s119, %s120
      %p132 = scmp.eq.s32.totalorder %s26, 7
      %p133 = por %p131, %p132
      %p135 = scmp.ne.s32.totalorder %s120, %s134
      %p136 = scmp.eq.s32.totalorder %s26, 0
      %p137 = por %p135, %p136
      %s139 = sadd.s32 %s138, 1
      %p142 = scmp.eq.s32.totalorder %s20, 7
      %p143 = scmp.ne.s32.totalorder %s138, %s140
      %p144 = scmp.eq.s32.totalorder %s20, 0
      %p145 = por %p143, %p144
      %p146 = scmp.ne.s32.totalorder %s138, %s140
      %p147 = scmp.eq.s32.totalorder %s25, 7
      %p148 = por %p146, %p147
      %p149 = scmp.ne.s32.totalorder %s140, %s141
      %p150 = scmp.eq.s32.totalorder %s25, 0
      %p151 = por %p149, %p150
      %p152 = scmp.ne.s32.totalorder %s140, %s141
      %p153 = scmp.eq.s32.totalorder %s26, 7
      %p154 = por %p152, %p153
      %p156 = scmp.ne.s32.totalorder %s141, %s155
      %p157 = scmp.eq.s32.totalorder %s26, 0
      %p158 = por %p156, %p157
      %s160 = sadd.s32 %s159, 1
      %p163 = scmp.eq.s32.totalorder %s20, 7
      %p164 = scmp.ne.s32.totalorder %s159, %s161
      %p165 = scmp.eq.s32.totalorder %s20, 0
      %p166 = por %p164, %p165
      %p167 = scmp.ne.s32.totalorder %s159, %s161
      %p168 = scmp.eq.s32.totalorder %s25, 7
      %p169 = por %p167, %p168
      %p170 = scmp.ne.s32.totalorder %s161, %s162
      %p171 = scmp.eq.s32.totalorder %s25, 0
      %p172 = por %p170, %p171
      %p173 = scmp.ne.s32.totalorder %s161, %s162
      %p174 = scmp.eq.s32.totalorder %s26, 7
      %p175 = por %p173, %p174
      %p177 = scmp.ne.s32.totalorder %s162, %s176
      %p178 = scmp.eq.s32.totalorder %s26, 0
      %p179 = por %p177, %p178
      %s181 = sadd.s32 %s180, 1
      %p184 = scmp.eq.s32.totalorder %s20, 7
      %p185 = scmp.ne.s32.totalorder %s180, %s182
      %p186 = scmp.eq.s32.totalorder %s20, 0
      %p187 = por %p185, %p186
      %p188 = scmp.ne.s32.totalorder %s180, %s182
      %p189 = scmp.eq.s32.totalorder %s25, 7
      %p190 = por %p188, %p189
      %p191 = scmp.ne.s32.totalorder %s182, %s183
      %p192 = scmp.eq.s32.totalorder %s25, 0
      %p193 = por %p191, %p192
      %p194 = scmp.ne.s32.totalorder %s182, %s183
      %p195 = scmp.eq.s32.totalorder %s26, 7
      %p196 = por %p194, %p195
      %p198 = scmp.ne.s32.totalorder %s183, %s197
      %p199 = scmp.eq.s32.totalorder %s26, 0
      %p200 = por %p198, %p199
      %s202 = sadd.s32 %s201, 1
      %p205 = scmp.eq.s32.totalorder %s20, 7
      %p206 = scmp.ne.s32.totalorder %s201, %s203
      %p207 = scmp.eq.s32.totalorder %s20, 0
      %p208 = por %p206, %p207
      %p209 = scmp.ne.s32.totalorder %s201, %s203
      %p210 = scmp.eq.s32.totalorder %s25, 7
      %p211 = por %p209, %p210
      %p212 = scmp.ne.s32.totalorder %s203, %s204
      %p213 = scmp.eq.s32.totalorder %s25, 0
      %p214 = por %p212, %p213
      %p215 = scmp.ne.s32.totalorder %s203, %s204
      %p216 = scmp.eq.s32.totalorder %s26, 7
      %p217 = por %p215, %p216
      %p219 = scmp.ne.s32.totalorder %s204, %s218
      %p220 = scmp.eq.s32.totalorder %s26, 0
      %p221 = por %p219, %p220
      %s222 = ssub.s32 %s20, %s27
      %p223 = scmp.eq.s32.totalorder %s222, 0
      %s225 = sadd.s32 %s224, 1
      %s226 = scalar_select %p223, %s224, %s225
      %p229 = pneg %p223
      %p230 = scmp.eq.s32.totalorder %s20, 7
      %p231 = por %p229, %p230
      %p232 = scmp.ne.s32.totalorder %s224, %s227
      %p233 = scmp.eq.s32.totalorder %s20, 0
      %p234 = por %p232, %p233
      %p235 = scmp.ne.s32.totalorder %s224, %s227
      %p236 = scmp.eq.s32.totalorder %s25, 7
      %p237 = por %p235, %p236
      %p238 = scmp.ne.s32.totalorder %s227, %s228
      %p239 = scmp.eq.s32.totalorder %s25, 0
      %p240 = por %p238, %p239
      %p241 = scmp.ne.s32.totalorder %s227, %s228
      %p242 = scmp.eq.s32.totalorder %s26, 7
      %p243 = por %p241, %p242
      %p245 = scmp.ne.s32.totalorder %s228, %s244
      %p246 = scmp.eq.s32.totalorder %s26, 0
      %p247 = por %p245, %p246
      %p248 = scmp.le.s32.totalorder 1, %s20
      %p249 = scmp.lt.s32.totalorder %s20, 9
      %p250 = pnand %p248, %p249
      %p251 = pneg %p250
      // Predicated region
      $region9: #{hybrid_energy_forward.1} parent=5 // pred_check
        _
      $region10: #{hybrid_energy_forward.1} parent=5 // pred_check_branch
        %253 = sbr.rel (%p250) target = $region12
      $region11: #{hybrid_energy_forward.1} parent=5 // pred_region
        %s254 = ssub.s32 %s20, 1
        // Predicated region
        $region13: #{hybrid_energy_forward.1} parent=11 // pred_check
          %p255 = pneg %p67
        $region14: #{hybrid_energy_forward.1} parent=11 // pred_check_branch
          %257 = sbr.rel (%p255) target = $region16
        $region15: #{hybrid_energy_forward.1} parent=11 // pred_region
          _
        $region16: #{hybrid_energy_forward.1} parent=11 // pred_fallthru
          _
        // Predicated region
        $region17: #{hybrid_energy_forward.1} parent=11 // pred_check
          %p258 = pneg %p88
        $region18: #{hybrid_energy_forward.1} parent=11 // pred_check_branch
          %260 = sbr.rel (%p258) target = $region20
        $region19: #{hybrid_energy_forward.1} parent=11 // pred_region
          _
        $region20: #{hybrid_energy_forward.1} parent=11 // pred_fallthru
          _
        // Predicated region
        $region21: #{hybrid_energy_forward.1} parent=11 // pred_check
          %p261 = pneg %p109
        $region22: #{hybrid_energy_forward.1} parent=11 // pred_check_branch
          %263 = sbr.rel (%p261) target = $region24
        $region23: #{hybrid_energy_forward.1} parent=11 // pred_region
          _
        $region24: #{hybrid_energy_forward.1} parent=11 // pred_fallthru
          _
        // Predicated region
        $region25: #{hybrid_energy_forward.1} parent=11 // pred_check
          %p264 = pneg %p130
        $region26: #{hybrid_energy_forward.1} parent=11 // pred_check_branch
          %266 = sbr.rel (%p264) target = $region28
        $region27: #{hybrid_energy_forward.1} parent=11 // pred_region
          _
        $region28: #{hybrid_energy_forward.1} parent=11 // pred_fallthru
          _
        // Predicated region
        $region29: #{hybrid_energy_forward.1} parent=11 // pred_check
          %p267 = pneg %p151
        $region30: #{hybrid_energy_forward.1} parent=11 // pred_check_branch
          %269 = sbr.rel (%p267) target = $region32
        $region31: #{hybrid_energy_forward.1} parent=11 // pred_region
          _
        $region32: #{hybrid_energy_forward.1} parent=11 // pred_fallthru
          _
        // Predicated region
        $region33: #{hybrid_energy_forward.1} parent=11 // pred_check
          %p270 = pneg %p172
        $region34: #{hybrid_energy_forward.1} parent=11 // pred_check_branch
          %272 = sbr.rel (%p270) target = $region36
        $region35: #{hybrid_energy_forward.1} parent=11 // pred_region
          _
        $region36: #{hybrid_energy_forward.1} parent=11 // pred_fallthru
          _
        // Predicated region
        $region37: #{hybrid_energy_forward.1} parent=11 // pred_check
          %p273 = pneg %p193
        $region38: #{hybrid_energy_forward.1} parent=11 // pred_check_branch
          %275 = sbr.rel (%p273) target = $region40
        $region39: #{hybrid_energy_forward.1} parent=11 // pred_region
          _
        $region40: #{hybrid_energy_forward.1} parent=11 // pred_fallthru
          _
        // Predicated region
        $region41: #{hybrid_energy_forward.1} parent=11 // pred_check
          %p276 = pneg %p214
        $region42: #{hybrid_energy_forward.1} parent=11 // pred_check_branch
          %278 = sbr.rel (%p276) target = $region44
        $region43: #{hybrid_energy_forward.1} parent=11 // pred_region
          _
        $region44: #{hybrid_energy_forward.1} parent=11 // pred_fallthru
          _
      $region12: #{hybrid_energy_forward.1} parent=5 // pred_fallthru
        _
      %p279 = scmp.lt.s32.totalorder %s20, 8
      // Predicated region
      $region45: #{hybrid_energy_forward.1} parent=5 // pred_check
        %p280 = pneg %p279
      $region46: #{hybrid_energy_forward.1} parent=5 // pred_check_branch
        %282 = sbr.rel (%p280) target = $region48
      $region47: #{hybrid_energy_forward.1} parent=5 // pred_region
        // Predicated region
        $region49: #{hybrid_energy_forward.1} parent=47 // pred_check
          %p283 = pneg %p40
        $region50: #{hybrid_energy_forward.1} parent=47 // pred_check_branch
          %285 = sbr.rel (%p283) target = $region52
        $region51: #{hybrid_energy_forward.1} parent=47 // pred_region
          %p286 = scmp.lt.s32.totalorder %s20, 7
          %s287 = scalar_select %p286, %s20, 7
          %s288 = smul.addr %s287, 8
          %s289 = scalar_lea.vmem %s0, %s288
        $region52: #{hybrid_energy_forward.1} parent=47 // pred_fallthru
          _
      $region48: #{hybrid_energy_forward.1} parent=5 // pred_fallthru
        _
      %p290 = scmp.le.s32.totalorder 1, %s20
      %p291 = scmp.lt.s32.totalorder %s20, 9
      %p292 = pnand %p290, %p291
      %p293 = pneg %p292
      // Predicated region
      $region53: #{hybrid_energy_forward.1} parent=5 // pred_check
        _
      $region54: #{hybrid_energy_forward.1} parent=5 // pred_check_branch
        %295 = sbr.rel (%p292) target = $region56
      $region55: #{hybrid_energy_forward.1} parent=5 // pred_region
        %s296 = ssub.s32 %s20, 1
        %p297 = scmp.lt.s32.totalorder %s25, 7
        %s298 = scalar_select %p297, %s25, 7
        %s299 = smul.addr %s298, 8
        %s300 = scalar_lea.vmem %s0, %s299
        %p301 = pneg %p46
        %p302 = pneg %p43
        %p303 = pneg %p67
        %p304 = pneg %p64
        %p305 = pneg %p88
        %p306 = pneg %p85
        %p307 = pneg %p109
        %p308 = pneg %p106
        %p309 = pneg %p130
        %p310 = pneg %p127
        %p311 = pneg %p151
        %p312 = pneg %p148
        %p313 = pneg %p172
        %p314 = pneg %p169
        %p315 = pneg %p193
        %p316 = pneg %p190
        %p317 = pneg %p214
        %p318 = pneg %p211
        %p319 = pneg %p240
        %p320 = pneg %p237
        %s321 = sand.u32 %s227, 1
        %s322 = scalar_lea.sflag [#allocation4], %s321
        %s323 = sand.u32 %s227, 1
        %s324 = scalar_lea.vmem [#allocation3], %s323
        %p325 = scmp.lt.s32.totalorder %s25, 7
        %s326 = scalar_select %p325, %s25, 7
        %s327 = smul.addr %s326, 8
        %s328 = scalar_lea.vmem %s0, %s327
        %v330 = vld [vmem:[%s328] sm:$0xff]
        %v331 = vpack.c.bf16 %v330, %v330
        %v332 = vld [vmem:[%s1] sm:$0xf]
        %v333 = vld [vmem:[%s1 + $0x4] sm:$0xf]
        %v334 = vld [vmem:[%s1 + $0x8] sm:$0xf]
        %v335 = vld [vmem:[%s1 + $0xc] sm:$0xf]
        %v336 = vld [vmem:[%s1 + $0x10] sm:$0xf]
        %v337 = vld [vmem:[%s1 + $0x14] sm:$0xf]
        %v338 = vld [vmem:[%s1 + $0x18] sm:$0xf]
        %v339 = vld [vmem:[%s1 + $0x1c] sm:$0xf]
        %v340 = vld [vmem:[%s1 + $0x20] sm:$0xf]
        %v341 = vld [vmem:[%s1 + $0x24] sm:$0xf]
        %v342 = vld [vmem:[%s1 + $0x28] sm:$0xf]
        %v343 = vld [vmem:[%s1 + $0x2c] sm:$0xf]
        %v344 = vld [vmem:[%s1 + $0x30] sm:$0xf]
        %v345 = vld [vmem:[%s1 + $0x34] sm:$0xf]
        %v346 = vld [vmem:[%s1 + $0x38] sm:$0xf]
        %v347 = vld [vmem:[%s1 + $0x3c] sm:$0xf]
        %v348 = vld [vmem:[%s1 + $0x40] sm:$0xf]
        %v349 = vld [vmem:[%s1 + $0x44] sm:$0xf]
        %v350 = vld [vmem:[%s1 + $0x48] sm:$0xf]
        %v351 = vld [vmem:[%s1 + $0x4c] sm:$0xf]
        %v372 = vunpack.c.l.b16 %v332
        %v373 = vunpack.c.l.b16 %v333
        %v374 = vunpack.c.l.b16 %v334
        %v375 = vunpack.c.l.b16 %v335
        %v376 = vunpack.c.l.b16 %v336
        %v377 = vunpack.c.l.b16 %v337
        %v378 = vunpack.c.l.b16 %v338
        %v379 = vunpack.c.l.b16 %v339
        %v380 = vunpack.c.l.b16 %v340
        %v381 = vunpack.c.l.b16 %v341
        %v382 = vunpack.c.l.b16 %v342
        %v383 = vunpack.c.l.b16 %v343
        %v384 = vunpack.c.l.b16 %v344
        %v385 = vunpack.c.l.b16 %v345
        %v386 = vunpack.c.l.b16 %v346
        %v387 = vunpack.c.l.b16 %v347
        %v388 = vunpack.c.l.b16 %v348
        %v389 = vunpack.c.l.b16 %v349
        %v390 = vunpack.c.l.b16 %v350
        %v391 = vunpack.c.l.b16 %v351
        %v392 = vpack.c.b16 %v373, %v372
        %v393 = vpack.c.b16 %v375, %v374
        %v394 = vpack.c.b16 %v377, %v376
        %v395 = vpack.c.b16 %v379, %v378
        %v396 = vpack.c.b16 %v381, %v380
        %v397 = vpack.c.b16 %v383, %v382
        %v398 = vpack.c.b16 %v385, %v384
        %v399 = vpack.c.b16 %v387, %v386
        %v400 = vpack.c.b16 %v389, %v388
        %v401 = vpack.c.b16 %v391, %v390
        %vm402 = vcmask 64512
        %v404 = vsel %vm402, %v392, 0
        %v407 = vsel %vm402, %v393, 0
        %v410 = vsel %vm402, %v394, 0
        %v413 = vsel %vm402, %v395, 0
        %v416 = vsel %vm402, %v396, 0
        %v419 = vsel %vm402, %v397, 0
        %v422 = vsel %vm402, %v398, 0
        %v425 = vsel %vm402, %v399, 0
        %v428 = vsel %vm402, %v400, 0
        %v431 = vsel %vm402, %v401, 0
        %vm433 = vcmask 1043456
        %v435 = vsel %vm433, %v331, 0
        %437 = vmatpush.bf16.msra.mxu0 0
        %438 = vmatpush.bf16.msra.mxu0 0
        %439 = vmatpush.bf16.msra.mxu0 0
        %440 = vmatpush.bf16.msra.mxu0 0
        %441 = vmatpush.bf16.msra.mxu0 0
        %442 = vmatpush.bf16.msra.mxu0 0
        %443 = vmatpush.bf16.msra.mxu0 0
        %444 = vmatpush.bf16.msra.mxu0 %v435
        %445 = vmatmul.bf16.gmra.mxu0 %v404
        %v446 = vpop.f32.mrf.mxu0
        %v447 = vadd.f32 0.0, %v446
        %v448 = vpop.f32.mrf.mxu0
        %v449 = vadd.f32 0.0, %v448
        %450 = vmatmul.bf16.gmra.mxu0 %v407
        %v451 = vpop.f32.mrf.mxu0
        %v452 = vadd.f32 0.0, %v451
        %v453 = vpop.f32.mrf.mxu0
        %v454 = vadd.f32 0.0, %v453
        %455 = vmatmul.bf16.gmra.mxu0 %v410
        %v456 = vpop.f32.mrf.mxu0
        %v457 = vadd.f32 0.0, %v456
        %v458 = vpop.f32.mrf.mxu0
        %v459 = vadd.f32 0.0, %v458
        %460 = vmatmul.bf16.gmra.mxu0 %v413
        %v461 = vpop.f32.mrf.mxu0
        %v462 = vadd.f32 0.0, %v461
        %v463 = vpop.f32.mrf.mxu0
        %v464 = vadd.f32 0.0, %v463
        %465 = vmatmul.bf16.gmra.mxu0 %v416
        %v466 = vpop.f32.mrf.mxu0
        %v467 = vadd.f32 0.0, %v466
        %v468 = vpop.f32.mrf.mxu0
        %v469 = vadd.f32 0.0, %v468
        %470 = vmatmul.bf16.gmra.mxu0 %v419
        %v471 = vpop.f32.mrf.mxu0
        %v472 = vadd.f32 0.0, %v471
        %v473 = vpop.f32.mrf.mxu0
        %v474 = vadd.f32 0.0, %v473
        %475 = vmatmul.bf16.gmra.mxu0 %v422
        %v476 = vpop.f32.mrf.mxu0
        %v477 = vadd.f32 0.0, %v476
        %v478 = vpop.f32.mrf.mxu0
        %v479 = vadd.f32 0.0, %v478
        %480 = vmatmul.bf16.gmra.mxu0 %v425
        %v481 = vpop.f32.mrf.mxu0
        %v482 = vadd.f32 0.0, %v481
        %v483 = vpop.f32.mrf.mxu0
        %v484 = vadd.f32 0.0, %v483
        %485 = vmatmul.bf16.gmra.mxu0 %v428
        %v486 = vpop.f32.mrf.mxu0
        %v487 = vadd.f32 0.0, %v486
        %v488 = vpop.f32.mrf.mxu0
        %v489 = vadd.f32 0.0, %v488
        %490 = vmatmul.bf16.gmra.mxu0 %v431
        %v491 = vpop.f32.mrf.mxu0
        %v492 = vadd.f32 0.0, %v491
        %v493 = vpop.f32.mrf.mxu0
        %v494 = vadd.f32 0.0, %v493
        %495 = vdwg.mxu0
        %v496 = vmax.f32 %v447, 0.0
        %v497 = vmax.f32 %v449, 0.0
        %v498 = vmax.f32 %v452, 0.0
        %v499 = vmax.f32 %v454, 0.0
        %v500 = vmax.f32 %v457, 0.0
        %v501 = vmax.f32 %v459, 0.0
        %v502 = vmax.f32 %v462, 0.0
        %v503 = vmax.f32 %v464, 0.0
        %v504 = vmax.f32 %v467, 0.0
        %v505 = vmax.f32 %v469, 0.0
        %v506 = vmax.f32 %v472, 0.0
        %v507 = vmax.f32 %v474, 0.0
        %v508 = vmax.f32 %v477, 0.0
        %v509 = vmax.f32 %v479, 0.0
        %v510 = vmax.f32 %v482, 0.0
        %v511 = vmax.f32 %v484, 0.0
        %v512 = vld [vmem:[%s2] sm:$0xf]
        %v513 = vld [vmem:[%s2 + $0x4] sm:$0xf]
        %v514 = vld [vmem:[%s2 + $0x8] sm:$0xf]
        %v515 = vld [vmem:[%s2 + $0xc] sm:$0xf]
        %v516 = vld [vmem:[%s2 + $0x10] sm:$0xf]
        %v517 = vld [vmem:[%s2 + $0x14] sm:$0xf]
        %v518 = vld [vmem:[%s2 + $0x18] sm:$0xf]
        %v519 = vld [vmem:[%s2 + $0x1c] sm:$0xf]
        %v520 = vld [vmem:[%s2 + $0x20] sm:$0xf]
        %v521 = vld [vmem:[%s2 + $0x24] sm:$0xf]
        %v522 = vld [vmem:[%s2 + $0x28] sm:$0xf]
        %v523 = vld [vmem:[%s2 + $0x2c] sm:$0xf]
        %v524 = vld [vmem:[%s2 + $0x30] sm:$0xf]
        %v525 = vld [vmem:[%s2 + $0x34] sm:$0xf]
        %v526 = vld [vmem:[%s2 + $0x38] sm:$0xf]
        %v527 = vld [vmem:[%s2 + $0x3c] sm:$0xf]
        %v528 = vpack.c.bf16 %v497, %v496
        %v529 = vpack.c.bf16 %v499, %v498
        %v530 = vpack.c.bf16 %v501, %v500
        %v531 = vpack.c.bf16 %v503, %v502
        %v532 = vpack.c.bf16 %v505, %v504
        %v533 = vpack.c.bf16 %v507, %v506
        %v534 = vpack.c.bf16 %v509, %v508
        %v535 = vpack.c.bf16 %v511, %v510
        %v536 = vld [vmem:[%s3] sm:$0xff]
        %v537 = vld [vmem:[%s3 + $0x8] sm:$0xff]
        %v538 = vld [vmem:[%s3 + $0x10] sm:$0xff]
        %v539 = vld [vmem:[%s3 + $0x18] sm:$0xff]
        %v540 = vld [vmem:[%s3 + $0x20] sm:$0xff]
        %v541 = vld [vmem:[%s3 + $0x28] sm:$0xff]
        %v542 = vld [vmem:[%s3 + $0x30] sm:$0xff]
        %v543 = vld [vmem:[%s3 + $0x38] sm:$0xff]
        %v544 = vld [vmem:[%s3 + $0x40] sm:$0xff]
        %v545 = vld [vmem:[%s3 + $0x48] sm:$0xff]
        %v546 = vld [vmem:[%s3 + $0x50] sm:$0xff]
        %v547 = vld [vmem:[%s3 + $0x58] sm:$0xff]
        %v548 = vld [vmem:[%s3 + $0x60] sm:$0xff]
        %v549 = vld [vmem:[%s3 + $0x68] sm:$0xff]
        %v550 = vld [vmem:[%s3 + $0x70] sm:$0xff]
        %v551 = vld [vmem:[%s3 + $0x78] sm:$0xff]
        %553 = vset.pattern.permute.xlu0 0
        %554 = vperm.xlu0 %553, %v536
        %v555 = vpop.permute.xlu0 %554
        %558 = vset.pattern.permute.xlu0 0
        %559 = vperm.xlu0 %558, %v537
        %v560 = vpop.permute.xlu0 %559
        %563 = vset.pattern.permute.xlu0 0
        %564 = vperm.xlu0 %563, %v538
        %v565 = vpop.permute.xlu0 %564
        %568 = vset.pattern.permute.xlu0 0
        %569 = vperm.xlu0 %568, %v539
        %v570 = vpop.permute.xlu0 %569
        %573 = vset.pattern.permute.xlu0 0
        %574 = vperm.xlu0 %573, %v540
        %v575 = vpop.permute.xlu0 %574
        %578 = vset.pattern.permute.xlu0 0
        %579 = vperm.xlu0 %578, %v541
        %v580 = vpop.permute.xlu0 %579
        %583 = vset.pattern.permute.xlu0 0
        %584 = vperm.xlu0 %583, %v542
        %v585 = vpop.permute.xlu0 %584
        %588 = vset.pattern.permute.xlu0 0
        %589 = vperm.xlu0 %588, %v543
        %v590 = vpop.permute.xlu0 %589
        %593 = vset.pattern.permute.xlu0 0
        %594 = vperm.xlu0 %593, %v544
        %v595 = vpop.permute.xlu0 %594
        %598 = vset.pattern.permute.xlu0 0
        %599 = vperm.xlu0 %598, %v545
        %v600 = vpop.permute.xlu0 %599
        %603 = vset.pattern.permute.xlu0 0
        %604 = vperm.xlu0 %603, %v546
        %v605 = vpop.permute.xlu0 %604
        %608 = vset.pattern.permute.xlu0 0
        %609 = vperm.xlu0 %608, %v547
        %v610 = vpop.permute.xlu0 %609
        %613 = vset.pattern.permute.xlu0 0
        %614 = vperm.xlu0 %613, %v548
        %v615 = vpop.permute.xlu0 %614
        %618 = vset.pattern.permute.xlu0 0
        %619 = vperm.xlu0 %618, %v549
        %v620 = vpop.permute.xlu0 %619
        %623 = vset.pattern.permute.xlu0 0
        %624 = vperm.xlu0 %623, %v550
        %v625 = vpop.permute.xlu0 %624
        %628 = vset.pattern.permute.xlu0 0
        %629 = vperm.xlu0 %628, %v551
        %v630 = vpop.permute.xlu0 %629
        %v648 = vunpack.c.l.b16 %v512
        %v649 = vunpack.c.l.b16 %v513
        %v650 = vunpack.c.l.b16 %v514
        %v651 = vunpack.c.l.b16 %v515
        %v652 = vunpack.c.l.b16 %v516
        %v653 = vunpack.c.l.b16 %v517
        %v654 = vunpack.c.l.b16 %v518
        %v655 = vunpack.c.l.b16 %v519
        %v656 = vunpack.c.l.b16 %v520
        %v657 = vunpack.c.l.b16 %v521
        %v658 = vunpack.c.l.b16 %v522
        %v659 = vunpack.c.l.b16 %v523
        %v660 = vunpack.c.l.b16 %v524
        %v661 = vunpack.c.l.b16 %v525
        %v662 = vunpack.c.l.b16 %v526
        %v663 = vunpack.c.l.b16 %v527
        %v664 = vpack.c.b16 %v649, %v648
        %v665 = vpack.c.b16 %v651, %v650
        %v666 = vpack.c.b16 %v653, %v652
        %v667 = vpack.c.b16 %v655, %v654
        %v668 = vpack.c.b16 %v657, %v656
        %v669 = vpack.c.b16 %v659, %v658
        %v670 = vpack.c.b16 %v661, %v660
        %v671 = vpack.c.b16 %v663, %v662
        %680 = vmatpush.bf16.msra.mxu0 %v535
        %681 = vmatpush.bf16.msra.mxu0 %v534
        %682 = vmatpush.bf16.msra.mxu0 %v533
        %683 = vmatpush.bf16.msra.mxu0 %v532
        %684 = vmatpush.bf16.msra.mxu0 %v531
        %685 = vmatpush.bf16.msra.mxu0 %v530
        %686 = vmatpush.bf16.msra.mxu0 %v529
        %687 = vmatpush.bf16.msra.mxu0 %v528
        %688 = vmatmul.bf16.gmra.mxu0 %v664
        %v689 = vpop.f32.mrf.mxu0
        %v690 = vadd.f32 %v555, %v689
        %v691 = vpop.f32.mrf.mxu0
        %v692 = vadd.f32 %v560, %v691
        %693 = vmatmul.bf16.gmra.mxu0 %v665
        %v694 = vpop.f32.mrf.mxu0
        %v695 = vadd.f32 %v565, %v694
        %v696 = vpop.f32.mrf.mxu0
        %v697 = vadd.f32 %v570, %v696
        %698 = vmatmul.bf16.gmra.mxu0 %v666
        %v699 = vpop.f32.mrf.mxu0
        %v700 = vadd.f32 %v575, %v699
        %v701 = vpop.f32.mrf.mxu0
        %v702 = vadd.f32 %v580, %v701
        %703 = vmatmul.bf16.gmra.mxu0 %v667
        %v704 = vpop.f32.mrf.mxu0
        %v705 = vadd.f32 %v585, %v704
        %v706 = vpop.f32.mrf.mxu0
        %v707 = vadd.f32 %v590, %v706
        %708 = vmatmul.bf16.gmra.mxu0 %v668
        %v709 = vpop.f32.mrf.mxu0
        %v710 = vadd.f32 %v595, %v709
        %v711 = vpop.f32.mrf.mxu0
        %v712 = vadd.f32 %v600, %v711
        %713 = vmatmul.bf16.gmra.mxu0 %v669
        %v714 = vpop.f32.mrf.mxu0
        %v715 = vadd.f32 %v605, %v714
        %v716 = vpop.f32.mrf.mxu0
        %v717 = vadd.f32 %v610, %v716
        %718 = vmatmul.bf16.gmra.mxu0 %v670
        %v719 = vpop.f32.mrf.mxu0
        %v720 = vadd.f32 %v615, %v719
        %v721 = vpop.f32.mrf.mxu0
        %v722 = vadd.f32 %v620, %v721
        %723 = vmatmul.bf16.gmra.mxu0 %v671
        %v724 = vpop.f32.mrf.mxu0
        %v725 = vadd.f32 %v625, %v724
        %v726 = vpop.f32.mrf.mxu0
        %v727 = vadd.f32 %v630, %v726
        %728 = vdwg.mxu0
        %v729 = vlaneseq
        %v730 = vshrl.u32 %v729, 7
        %v731 = vadd.s32 %v730, 8
        %v732 = vadd.s32 %v730, 16
        %v733 = vadd.s32 %v730, 24
        %v734 = vadd.s32 %v730, 32
        %v735 = vadd.s32 %v730, 40
        %v736 = vadd.s32 %v730, 48
        %v737 = vadd.s32 %v730, 56
        %v738 = vadd.s32 %v730, 64
        %v739 = vadd.s32 %v730, 72
        %v740 = vadd.s32 %v730, 80
        %v741 = vadd.s32 %v730, 88
        %v742 = vadd.s32 %v730, 96
        %v743 = vadd.s32 %v730, 104
        %v744 = vadd.s32 %v730, 112
        %v745 = vadd.s32 %v730, 120
        %vm746 = vcmp.lt.s32.totalorder %v730, 64
        %vm747 = vcmp.lt.s32.totalorder %v731, 64
        %vm748 = vcmp.lt.s32.totalorder %v732, 64
        %vm749 = vcmp.lt.s32.totalorder %v733, 64
        %vm750 = vcmp.lt.s32.totalorder %v734, 64
        %vm751 = vcmp.lt.s32.totalorder %v735, 64
        %vm752 = vcmp.lt.s32.totalorder %v736, 64
        %vm753 = vcmp.lt.s32.totalorder %v737, 64
        %vm754 = vcmp.lt.s32.totalorder %v738, 64
        %vm755 = vcmp.lt.s32.totalorder %v739, 64
        %vm756 = vcmp.lt.s32.totalorder %v740, 64
        %vm757 = vcmp.lt.s32.totalorder %v741, 64
        %vm758 = vcmp.lt.s32.totalorder %v742, 64
        %vm759 = vcmp.lt.s32.totalorder %v743, 64
        %vm760 = vcmp.lt.s32.totalorder %v744, 64
        %vm761 = vcmp.lt.s32.totalorder %v745, 64
        %v762 = vmax.f32 %v690, 0.0
        %v763 = vmax.f32 %v692, 0.0
        %v764 = vmax.f32 %v695, 0.0
        %v765 = vmax.f32 %v697, 0.0
        %v766 = vmax.f32 %v700, 0.0
        %v767 = vmax.f32 %v702, 0.0
        %v768 = vmax.f32 %v705, 0.0
        %v769 = vmax.f32 %v707, 0.0
        %v770 = vmax.f32 %v710, 0.0
        %v771 = vmax.f32 %v712, 0.0
        %v772 = vmax.f32 %v715, 0.0
        %v773 = vmax.f32 %v717, 0.0
        %v774 = vmax.f32 %v720, 0.0
        %v775 = vmax.f32 %v722, 0.0
        %v776 = vmax.f32 %v725, 0.0
        %v777 = vmax.f32 %v727, 0.0
        %v778 = vsel %vm746, 1, 0
        %v779 = vsel %vm747, 1, 0
        %v780 = vsel %vm748, 1, 0
        %v781 = vsel %vm749, 1, 0
        %v782 = vsel %vm750, 1, 0
        %v783 = vsel %vm751, 1, 0
        %v784 = vsel %vm752, 1, 0
        %v785 = vsel %vm753, 1, 0
        %v786 = vsel %vm754, 1, 0
        %v787 = vsel %vm755, 1, 0
        %v788 = vsel %vm756, 1, 0
        %v789 = vsel %vm757, 1, 0
        %v790 = vsel %vm758, 1, 0
        %v791 = vsel %vm759, 1, 0
        %v792 = vsel %vm760, 1, 0
        %v793 = vsel %vm761, 1, 0
        %vm794 = vcmp.eq.s32.totalorder %v778, 1
        %vm795 = vcmp.eq.s32.totalorder %v779, 1
        %vm796 = vcmp.eq.s32.totalorder %v780, 1
        %vm797 = vcmp.eq.s32.totalorder %v781, 1
        %vm798 = vcmp.eq.s32.totalorder %v782, 1
        %vm799 = vcmp.eq.s32.totalorder %v783, 1
        %vm800 = vcmp.eq.s32.totalorder %v784, 1
        %vm801 = vcmp.eq.s32.totalorder %v785, 1
        %vm802 = vcmp.eq.s32.totalorder %v786, 1
        %vm803 = vcmp.eq.s32.totalorder %v787, 1
        %vm804 = vcmp.eq.s32.totalorder %v788, 1
        %vm805 = vcmp.eq.s32.totalorder %v789, 1
        %vm806 = vcmp.eq.s32.totalorder %v790, 1
        %vm807 = vcmp.eq.s32.totalorder %v791, 1
        %vm808 = vcmp.eq.s32.totalorder %v792, 1
        %vm809 = vcmp.eq.s32.totalorder %v793, 1
        %v810 = vsel %vm794, %v762, %v690
        %v811 = vsel %vm795, %v763, %v692
        %v812 = vsel %vm796, %v764, %v695
        %v813 = vsel %vm797, %v765, %v697
        %v814 = vsel %vm798, %v766, %v700
        %v815 = vsel %vm799, %v767, %v702
        %v816 = vsel %vm800, %v768, %v705
        %v817 = vsel %vm801, %v769, %v707
        %v818 = vsel %vm802, %v770, %v710
        %v819 = vsel %vm803, %v771, %v712
        %v820 = vsel %vm804, %v772, %v715
        %v821 = vsel %vm805, %v773, %v717
        %v822 = vsel %vm806, %v774, %v720
        %v823 = vsel %vm807, %v775, %v722
        %v824 = vsel %vm808, %v776, %v725
        %v825 = vsel %vm809, %v777, %v727
        %v826 = vld [vmem:[%s4] sm:$0xf]
        %v827 = vld [vmem:[%s4 + $0x4] sm:$0xf]
        %v828 = vld [vmem:[%s4 + $0x8] sm:$0xf]
        %v829 = vld [vmem:[%s4 + $0xc] sm:$0xf]
        %v830 = vpack.c.bf16 %v811, %v810
        %v831 = vpack.c.bf16 %v813, %v812
        %v832 = vpack.c.bf16 %v815, %v814
        %v833 = vpack.c.bf16 %v817, %v816
        %v834 = vpack.c.bf16 %v819, %v818
        %v835 = vpack.c.bf16 %v821, %v820
        %v836 = vpack.c.bf16 %v823, %v822
        %v837 = vpack.c.bf16 %v825, %v824
        %v842 = vunpack.c.l.b16 %v826
        %v843 = vunpack.c.l.b16 %v827
        %v844 = vunpack.c.l.b16 %v828
        %v845 = vunpack.c.l.b16 %v829
        %v846 = vpack.c.b16 %v843, %v842
        %v847 = vpack.c.b16 %v845, %v844
        %850 = vmatpush.bf16.msra.mxu0 %v837
        %851 = vmatpush.bf16.msra.mxu0 %v836
        %852 = vmatpush.bf16.msra.mxu0 %v835
        %853 = vmatpush.bf16.msra.mxu0 %v834
        %854 = vmatpush.bf16.msra.mxu0 %v833
        %855 = vmatpush.bf16.msra.mxu0 %v832
        %856 = vmatpush.bf16.msra.mxu0 %v831
        %857 = vmatpush.bf16.msra.mxu0 %v830
        %858 = vmatmul.bf16.gmra.mxu0 %v846
        %v859 = vpop.f32.mrf.mxu0
        %v860 = vadd.f32 %v487, %v859
        %v861 = vpop.f32.mrf.mxu0
        %v862 = vadd.f32 %v489, %v861
        %863 = vmatmul.bf16.gmra.mxu0 %v847
        %v864 = vpop.f32.mrf.mxu0
        %v865 = vadd.f32 %v492, %v864
        %v866 = vpop.f32.mrf.mxu0
        %v867 = vadd.f32 %v494, %v866
        %868 = vdwg.mxu0
        %v869 = vmax.f32 %v860, 0.0
        %v870 = vmax.f32 %v862, 0.0
        %v871 = vmax.f32 %v865, 0.0
        %v872 = vmax.f32 %v867, 0.0
        %v873 = vld [vmem:[%s5] sm:$0xf]
        %v874 = vld [vmem:[%s5 + $0x4] sm:$0xf]
        %v875 = vld [vmem:[%s5 + $0x8] sm:$0xf]
        %v876 = vld [vmem:[%s5 + $0xc] sm:$0xf]
        %v877 = vpack.c.bf16 %v870, %v869
        %v878 = vpack.c.bf16 %v872, %v871
        %v879 = vld [vmem:[%s6] sm:$0xff]
        %v880 = vld [vmem:[%s6 + $0x8] sm:$0xff]
        %v881 = vld [vmem:[%s6 + $0x10] sm:$0xff]
        %v882 = vld [vmem:[%s6 + $0x18] sm:$0xff]
        %884 = vset.pattern.permute.xlu0 0
        %885 = vperm.xlu0 %884, %v879
        %v886 = vpop.permute.xlu0 %885
        %889 = vset.pattern.permute.xlu0 0
        %890 = vperm.xlu0 %889, %v880
        %v891 = vpop.permute.xlu0 %890
        %894 = vset.pattern.permute.xlu0 0
        %895 = vperm.xlu0 %894, %v881
        %v896 = vpop.permute.xlu0 %895
        %899 = vset.pattern.permute.xlu0 0
        %900 = vperm.xlu0 %899, %v882
        %v901 = vpop.permute.xlu0 %900
        %v907 = vunpack.c.l.b16 %v873
        %v908 = vunpack.c.l.b16 %v874
        %v909 = vunpack.c.l.b16 %v875
        %v910 = vunpack.c.l.b16 %v876
        %v911 = vpack.c.b16 %v908, %v907
        %v912 = vpack.c.b16 %v910, %v909
        %vm913 = vcmask 261120
        %v915 = vsel %vm913, %v911, 0
        %v918 = vsel %vm913, %v912, 0
        %920 = vmatpush.bf16.msra.mxu0 0
        %921 = vmatpush.bf16.msra.mxu0 0
        %922 = vmatpush.bf16.msra.mxu0 0
        %923 = vmatpush.bf16.msra.mxu0 0
        %924 = vmatpush.bf16.msra.mxu0 0
        %925 = vmatpush.bf16.msra.mxu0 0
        %926 = vmatpush.bf16.msra.mxu0 %v878
        %927 = vmatpush.bf16.msra.mxu0 %v877
        %928 = vmatmul.bf16.gmra.mxu0 %v915
        %v929 = vpop.f32.mrf.mxu0
        %v930 = vadd.f32 %v886, %v929
        %v931 = vpop.f32.mrf.mxu0
        %v932 = vadd.f32 %v891, %v931
        %933 = vmatmul.bf16.gmra.mxu0 %v918
        %v934 = vpop.f32.mrf.mxu0
        %v935 = vadd.f32 %v896, %v934
        %v936 = vpop.f32.mrf.mxu0
        %v937 = vadd.f32 %v901, %v936
        %938 = vdwg.mxu0
        %v939 = vmax.f32 %v930, 0.0
        %v940 = vmax.f32 %v932, 0.0
        %v941 = vmax.f32 %v935, 0.0
        %v942 = vmax.f32 %v937, 0.0
        %v943 = vld [vmem:[%s7] sm:$0xff]
        %v944 = vld [vmem:[%s7 + $0x8] sm:$0xff]
        %v945 = vld [vmem:[%s7 + $0x10] sm:$0xff]
        %v946 = vld [vmem:[%s7 + $0x18] sm:$0xff]
        %948 = vset.pattern.permute.xlu0 0
        %949 = vperm.xlu0 %948, %v943
        %v950 = vpop.permute.xlu0 %949
        %953 = vset.pattern.permute.xlu0 0
        %954 = vperm.xlu0 %953, %v944
        %v955 = vpop.permute.xlu0 %954
        %958 = vset.pattern.permute.xlu0 0
        %959 = vperm.xlu0 %958, %v945
        %v960 = vpop.permute.xlu0 %959
        %963 = vset.pattern.permute.xlu0 0
        %964 = vperm.xlu0 %963, %v946
        %v965 = vpop.permute.xlu0 %964
        %v967 = vmul.f32 %v939, %v950
        %v968 = vmul.f32 %v940, %v955
        %v969 = vmul.f32 %v941, %v960
        %v970 = vmul.f32 %v942, %v965
        %v971 = vadd.f32 %v967, %v968
        %v972 = vadd.f32 %v971, %v969
        %v973 = vadd.f32 %v972, %v970
        %v974 = vrot.slane %v973, 4
        %v975 = vadd.f32 %v973, %v974
        %v976 = vrot.slane %v975, 2
        %v977 = vadd.f32 %v975, %v976
        %v978 = vrot.slane %v977, 1
        %v979 = vadd.f32 %v977, %v978
        %v980 = vld [vmem:[#allocation2] sm:$0x1]
        %982 = vset.pattern.permute.xlu0 0
        %983 = vperm.xlu0 %982, %v980
        %v984 = vpop.permute.xlu0 %983
        %v986 = vperm.slane %v984, 0
        %v987 = vadd.f32 %v979, %v986
        %988 = vst [vmem:[%s324] sm:$0x1] %v987
        %s989 = sand.u32 %s227, 1
        %s990 = scalar_lea.sflag [#allocation4], %s989
        %s991 = sand.u32 %s227, 1
        %s992 = scalar_lea.vmem [#allocation3], %s991
        // Predicated region
        $region57: #{hybrid_energy_forward.1} parent=55 // pred_check
          %p993 = pneg %p237
        $region58: #{hybrid_energy_forward.1} parent=55 // pred_check_branch
          %995 = sbr.rel (%p993) target = $region60
        $region59: #{hybrid_energy_forward.1} parent=55 // pred_region
          %997 = vsyncadd %s990, 0
          %s998 = scalar_lea.hbm %s9, %s25
          %s1000 = sshll.u32 %s992, 4
          %s1001 = int_to_ptr.vmem [resolvable:$true] %s1000
          %s1002 = sshll.u32 %s998, 4
          %s1003 = int_to_ptr.hbm [resolvable:$true] %s1002
          %1005 = dma.vmem_to_hbm [thread:$0]  %s1001, 16, %s1003, %s990
        $region60: #{hybrid_energy_forward.1} parent=55 // pred_fallthru
          _
      $region56: #{hybrid_energy_forward.1} parent=5 // pred_fallthru
        _
      %p1006 = scmp.le.s32.totalorder 2, %s20
      // Predicated region
      $region61: #{hybrid_energy_forward.1} parent=5 // pred_check
        %p1007 = pneg %p1006
      $region62: #{hybrid_energy_forward.1} parent=5 // pred_check_branch
        %1009 = sbr.rel (%p1007) target = $region64
      $region63: #{hybrid_energy_forward.1} parent=5 // pred_region
        %s1010 = ssub.s32 %s20, 2
        // Predicated region
        $region65: #{hybrid_energy_forward.1} parent=63 // pred_check
          %p1011 = pneg %p243
        $region66: #{hybrid_energy_forward.1} parent=63 // pred_check_branch
          %1013 = sbr.rel (%p1011) target = $region68
        $region67: #{hybrid_energy_forward.1} parent=63 // pred_region
          %s1014 = sand.u32 %s228, 1
          %s1015 = scalar_lea.sflag [#allocation4], %s1014
          %s1016 = sand.u32 %s228, 1
          %s1017 = scalar_lea.vmem [#allocation3], %s1016
          %1019 = dma.done %s1015, 16
        $region68: #{hybrid_energy_forward.1} parent=63 // pred_fallthru
          _
      $region64: #{hybrid_energy_forward.1} parent=5 // pred_fallthru
        _
    $region6: #{hybrid_energy_forward.1} parent=1 // loop_footer
      %s24 = sadd.s32 1, %s20
    $region7: #{hybrid_energy_forward.1} parent=1 // loop_footer_branch
      %19 = sbr.rel target = $region3
    $region8: #{hybrid_energy_forward.1} parent=1 // loop_exit
      _
    %1020 = vsyncpa [#allocation4], 1
    %s1021 = scalar_lea.sflag [#allocation4], 1
    %1022 = vsyncpa %s1021, 1

</llo_original>
